<compile_context>
chip_gen: v5e
topology: v5e:2x2
jax: 0.10.0
libtpu: 0.0.40
codegen_flags: <defaults>
</compile_context>

<pallas_src>
import jax
import jax.numpy as jnp
from jax import lax
from jax.experimental import pallas as pl
from jax.experimental.pallas import tpu as pltpu

_LANES = 128
_SUBLANES = 8


def _round_up(x, m):
    return (x + m - 1) // m * m


def _make_weighted_loss_kernel(B, tb, HT, chunk, need_row_mask):
    """Builds the per-tile kernel (all sizes are static Python ints).

    pred_ref, targ_ref : [tb, HT]  native dtype (cast to f32 in-kernel)
    plane_ref          : [3, HT]   f32 rows: weights, hist-masked 1/weights,
                                   action mask
    out_ref            : [1, 8, 128] f32 per-tile partial sums in lanes 0..2
    """
    n_chunks = (HT + chunk - 1) // chunk

    def kernel(pred_ref, targ_ref, plane_ref, out_ref):
        if need_row_mask:
            # Rows beyond B in the (only partially valid) edge block hold
            # unspecified data -> select, don't multiply (avoids NaN/Inf).
            row0 = pl.program_id(0) * tb
            rows = lax.broadcasted_iota(jnp.int32, (tb, 1), 0) + row0
            valid = rows < B                                   # [tb, 1]

        s = jnp.zeros((3, 1), jnp.float32)
        # Static lane-chunk loop keeps the batch-sum accumulator <= 8 vregs.
        for c in range(n_chunks):
            c0 = c * chunk
            c1 = min(c0 + chunk, HT)
            d = (pred_ref[:, c0:c1].astype(jnp.float32)
                 - targ_ref[:, c0:c1].astype(jnp.float32))
            loss = d * d                                       # [tb, cw]
            if need_row_mask:
                loss = jnp.where(valid, loss, 0.0)
            # Batch-first reduction: pure VPU adds, then the (batch
            # independent) plane multiplies only touch O(cw) elements.
            loss_b = jnp.sum(loss, axis=0, keepdims=True)      # [1, cw]
            s = s + jnp.sum(loss_b * plane_ref[:, c0:c1],
                            axis=1, keepdims=True)             # [3, 1]

        s0, s1, s2 = s[0, 0], s[1, 0], s[2, 0]
        lane = lax.broadcasted_iota(jnp.int32, out_ref.shape, 2)
        out_ref[...] = jnp.where(lane == 0, s0,
                       jnp.where(lane == 1, s1,
                       jnp.where(lane == 2, s2, 0.0)))

    return kernel


class WeightedLossPallas:
    """JAX/Pallas port of WeightedLoss (WeightedL2 flavor)."""

    def __init__(self, weights, history_length=1, action_indices=None,
                 target_tile_bytes=4 * 1024 * 1024):
        self.weights = jnp.asarray(weights, dtype=jnp.float32)     # [H, T]
        self.history_length = int(history_length)
        self.action_indices = (None if action_indices is None
                               else tuple(int(i) for i in action_indices))
        # ~4 MiB per input tile: 2 inputs x 2 pipeline buffers = 16 MiB plus
        # f32 temporaries fits comfortably under the explicit 48 MiB VMEM
        # limit on v5e / v6e / v7x while amortizing per-grid-step overhead.
        self.target_tile_bytes = int(target_tile_bytes)

    def __call__(self, pred, targ, loss_weights=None):
        weights = (self.weights if loss_weights is None
                   else jnp.asarray(loss_weights, dtype=jnp.float32))

        B, H, T = pred.shape
        assert targ.shape == (B, H, T)
        assert weights.shape == (H, T)
        HT = H * T

        # ---- weight planes (built once per call, O(H*T), un-padded) -------
        h_idx = jnp.arange(H, dtype=jnp.int32)[:, None]            # [H, 1]
        hist_mask = h_idx < self.history_length
        plane_w = weights                                          # [H, T]
        plane_cond = jnp.where(hist_mask, 1.0 / weights, 0.0)      # [H, T]
        if self.action_indices is not None and len(self.action_indices) > 0:
            act_1d = jnp.zeros((T,), jnp.float32).at[
                jnp.asarray(self.action_indices, jnp.int32)].set(1.0)
            n_act = len(self.action_indices)
        else:
            act_1d = jnp.zeros((T,), jnp.float32)
            n_act = 0
        plane_act = jnp.broadcast_to(act_1d[None, :], (H, T))
        planes = jnp.stack([plane_w, plane_cond, plane_act]).reshape(3, HT)

        # ---- batch tiling (no padding of pred/targ: reshape only) ---------
        itemsize = jnp.dtype(pred.dtype).itemsize
        rows_cap = max(_SUBLANES,
                       (self.target_tile_bytes // (HT * itemsize))
                       // _SUBLANES * _SUBLANES)
        tb = int(min(rows_cap, _round_up(B, _SUBLANES)))
        # Megacore: keep >= 2 balanced tiles on the "parallel" axis when the
        # batch is big enough to split.
        if B > _SUBLANES and tb >= _round_up(B, _SUBLANES):
            tb = _round_up(pl.cdiv(B, 2), _SUBLANES)
        num_tiles = pl.cdiv(B, tb)
        need_row_mask = (num_tiles * tb != B)

        # Lane-chunk the in-kernel reduction so its accumulator stays small.
        chunk = min(HT, 8 * _LANES)

        kernel = _make_weighted_loss_kernel(B, tb, HT, chunk, need_row_mask)

        pred2 = pred.reshape(B, HT)    # contiguous collapse -> no HBM copy
        targ2 = targ.reshape(B, HT)

        cost = pl.CostEstimate(
            flops=5 * B * HT,
            transcendentals=0,
            bytes_accessed=(2 * B * HT * itemsize + 3 * HT * 4
                            + num_tiles * _SUBLANES * _LANES * 4),
        )

        partials = pl.pallas_call(
            kernel,
            out_shape=jax.ShapeDtypeStruct((num_tiles, _SUBLANES, _LANES),
                                           jnp.float32),
            grid_spec=pltpu.PrefetchScalarGridSpec(
                num_scalar_prefetch=0,
                grid=(num_tiles,),
                in_specs=[
                    pl.BlockSpec((tb, HT), lambda i: (i, 0)),      # pred
                    pl.BlockSpec((tb, HT), lambda i: (i, 0)),      # targ
                    pl.BlockSpec((3, HT), lambda i: (0, 0)),       # planes
                ],
                out_specs=pl.BlockSpec((1, _SUBLANES, _LANES),
                                       lambda i: (i, 0, 0)),
            ),
            compiler_params=pltpu.CompilerParams(
                dimension_semantics=("parallel",),
                vmem_limit_bytes=48 * 1024 * 1024),
            cost_estimate=cost,
        )(pred2, targ2, planes)

        sums = jnp.sum(partials[:, 0, :3], axis=0)                 # [3]

        weighted_loss = sums[0] / jnp.float32(B * H * T)
        # Reference slices loss[:, :history_length], which clamps to H.
        hist_eff = min(self.history_length, H)
        # NOTE: hist_eff == 0 -> 0/0 = nan, same as torch's mean of empty.
        cond_loss = sums[1] / jnp.float32(B * hist_eff * T)
        if n_act > 0:
            action_loss = sums[2] / jnp.float32(B * H * n_act)
        else:
            # Traced f32 scalar (value 0, matching torch) for pytree/dtype
            # consistency under jit.
            action_loss = jnp.float32(0.0)
        return weighted_loss, {'cond_loss': cond_loss,
                               'action_loss': action_loss}


def _reference(pred, targ, weights, history_length, action_indices):
    loss = (pred - targ) ** 2
    weighted_loss = (loss * weights).mean()
    cond_loss = (loss[:, :history_length] / weights[:history_length]).mean()
    action_loss = loss[:, :, jnp.asarray(action_indices)].mean()
    return weighted_loss, cond_loss, action_loss


if __name__ == "__main__":
    key = jax.random.PRNGKey(0)
    B, H, T = 2, 8, 16          # batch x horizon x transition_dim
    history_length = 2
    action_indices = [0, 1]     # first two dims are "actions"

    k1, k2 = jax.random.split(key)
    pred = jax.random.normal(k1, (B, H, T), dtype=jnp.float32)
    targ = jax.random.normal(k2, (B, H, T), dtype=jnp.float32)

    # deterministic, strictly-positive weight buffer [H, T]
    weights = 0.5 + jnp.arange(H * T, dtype=jnp.float32).reshape(H, T) / (H * T)

    loss_mod = WeightedLossPallas(weights,
                                  history_length=history_length,
                                  action_indices=action_indices)

    wl, info = loss_mod(pred, targ)
    wl = jax.block_until_ready(wl)
    cl = jax.block_until_ready(info['cond_loss'])
    al = jax.block_until_ready(info['action_loss'])

    ref_wl, ref_cl, ref_al = _reference(pred, targ, weights,
                                        history_length, action_indices)
    assert jnp.allclose(wl, ref_wl, rtol=1e-5, atol=1e-5)
    assert jnp.allclose(cl, ref_cl, rtol=1e-5, atol=1e-5)
    assert jnp.allclose(al, ref_al, rtol=1e-5, atol=1e-5)

    print("KERNEL_OK")
</pallas_src>

<mosaic_0001>
module attributes {stable_mosaic.version = 11 : i64} {
  func.func @kernel(%arg0: i32, %arg1: memref<8x128xf32, #tpu.memory_space<vmem>>, %arg2: memref<8x128xf32, #tpu.memory_space<vmem>>, %arg3: memref<3x128xf32, #tpu.memory_space<vmem>>, %arg4: memref<1x8x128xf32, #tpu.memory_space<vmem>>) attributes {dimension_semantics = [#tpu.dimension_semantics<parallel>], iteration_bounds = array<i64: 1>, scalar_prefetch = 0 : i64, scratch_operands = 0 : i64, tpu.core_type = #tpu.core_type<tc>, window_params = [{transform_indices = @transform_0, window_bounds = array<i64: 8, 128>}, {transform_indices = @transform_1, window_bounds = array<i64: 8, 128>}, {pipeline_mode = #tpu.pipeline_mode<synchronous>, transform_indices = @transform_2, window_bounds = array<i64: 3, 128>}, {transform_indices = @transform_3, window_bounds = array<i64: 1, 8, 128>}]} {
    %c8_i32 = arith.constant 8 : i32
    %0 = arith.muli %arg0, %c8_i32 : i32
    %1 = tpu.iota {dimensions = array<i32: 0>} : vector<8x1xi32>
    %2 = vector.broadcast %0 : i32 to vector<8x1xi32>
    %3 = arith.addi %1, %2 : vector<8x1xi32>
    %c2_i32 = arith.constant 2 : i32
    %4 = vector.broadcast %c2_i32 : i32 to vector<8x1xi32>
    %5 = arith.cmpi slt, %3, %4 : vector<8x1xi32>
    %cst = arith.constant 0.000000e+00 : f32
    %6 = vector.broadcast %cst : f32 to vector<3x1xf32>
    %c0 = arith.constant 0 : index
    %c0_0 = arith.constant 0 : index
    %7 = vector.load %arg1[%c0, %c0_0] : memref<8x128xf32, #tpu.memory_space<vmem>>, vector<8x128xf32>
    %c0_1 = arith.constant 0 : index
    %c0_2 = arith.constant 0 : index
    %8 = vector.load %arg2[%c0_1, %c0_2] : memref<8x128xf32, #tpu.memory_space<vmem>>, vector<8x128xf32>
    %9 = arith.subf %7, %8 : vector<8x128xf32>
    %10 = arith.mulf %9, %9 : vector<8x128xf32>
    %cst_3 = arith.constant 0.000000e+00 : f32
    %11 = vector.shape_cast %5 : vector<8x1xi1> to vector<8x1xi1>
    %12 = vector.broadcast %11 : vector<8x1xi1> to vector<8x128xi1>
    %13 = vector.broadcast %cst_3 : f32 to vector<8x128xf32>
    %14 = arith.select %12, %10, %13 : vector<8x128xi1>, vector<8x128xf32>
    %cst_4 = arith.constant dense<0.000000e+00> : vector<128xf32>
    %15 = vector.multi_reduction <add>, %14, %cst_4 [0] : vector<8x128xf32> to vector<128xf32>
    %16 = vector.shape_cast %15 : vector<128xf32> to vector<1x128xf32>
    %c0_5 = arith.constant 0 : index
    %c0_6 = arith.constant 0 : index
    %17 = vector.load %arg3[%c0_5, %c0_6] : memref<3x128xf32, #tpu.memory_space<vmem>>, vector<3x128xf32>
    %18 = vector.broadcast %16 : vector<1x128xf32> to vector<3x128xf32>
    %19 = arith.mulf %18, %17 : vector<3x128xf32>
    %cst_7 = arith.constant dense<0.000000e+00> : vector<3xf32>
    %20 = vector.multi_reduction <add>, %19, %cst_7 [1] : vector<3x128xf32> to vector<3xf32>
    %21 = vector.shape_cast %20 : vector<3xf32> to vector<3x1xf32>
    %22 = arith.addf %6, %21 : vector<3x1xf32>
    %23 = vector.extract_strided_slice %22 {offsets = [0, 0], sizes = [1, 1], strides = [1, 1]} : vector<3x1xf32> to vector<1x1xf32>
    %24 = vector.extract %23[0, 0] : f32 from vector<1x1xf32>
    %25 = vector.extract_strided_slice %22 {offsets = [1, 0], sizes = [1, 1], strides = [1, 1]} : vector<3x1xf32> to vector<1x1xf32>
    %26 = vector.extract %25[0, 0] : f32 from vector<1x1xf32>
    %27 = vector.extract_strided_slice %22 {offsets = [2, 0], sizes = [1, 1], strides = [1, 1]} : vector<3x1xf32> to vector<1x1xf32>
    %28 = vector.extract %27[0, 0] : f32 from vector<1x1xf32>
    %29 = tpu.iota {dimensions = array<i32: 2>} : vector<1x8x128xi32>
    %c0_i32 = arith.constant 0 : i32
    %30 = vector.broadcast %c0_i32 : i32 to vector<1x8x128xi32>
    %31 = arith.cmpi eq, %29, %30 : vector<1x8x128xi32>
    %c1_i32 = arith.constant 1 : i32
    %32 = vector.broadcast %c1_i32 : i32 to vector<1x8x128xi32>
    %33 = arith.cmpi eq, %29, %32 : vector<1x8x128xi32>
    %c2_i32_8 = arith.constant 2 : i32
    %34 = vector.broadcast %c2_i32_8 : i32 to vector<1x8x128xi32>
    %35 = arith.cmpi eq, %29, %34 : vector<1x8x128xi32>
    %cst_9 = arith.constant 0.000000e+00 : f32
    %36 = vector.broadcast %28 : f32 to vector<1x8x128xf32>
    %37 = vector.broadcast %cst_9 : f32 to vector<1x8x128xf32>
    %38 = arith.select %35, %36, %37 : vector<1x8x128xi1>, vector<1x8x128xf32>
    %39 = vector.broadcast %26 : f32 to vector<1x8x128xf32>
    %40 = arith.select %33, %39, %38 : vector<1x8x128xi1>, vector<1x8x128xf32>
    %41 = vector.broadcast %24 : f32 to vector<1x8x128xf32>
    %42 = arith.select %31, %41, %40 : vector<1x8x128xi1>, vector<1x8x128xf32>
    %c0_10 = arith.constant 0 : index
    %c0_11 = arith.constant 0 : index
    %c0_12 = arith.constant 0 : index
    %43 = vector.load %arg4[%c0_10, %c0_11, %c0_12] : memref<1x8x128xf32, #tpu.memory_space<vmem>>, vector<1x8x128xf32>
    tpu.vector_store %arg4[%c0_10, %c0_11, %c0_12], %42 {strides = array<i32>} : memref<1x8x128xf32, #tpu.memory_space<vmem>>, vector<1x8x128xf32>,
    return
  }
  func.func @transform_0(%arg0: i32) -> (i32, i32) {
    %c0_i32 = arith.constant 0 : i32
    %c0_i32_0 = arith.constant 0 : i32
    return %arg0, %c0_i32 : i32, i32
  }
  func.func @transform_1(%arg0: i32) -> (i32, i32) {
    %c0_i32 = arith.constant 0 : i32
    %c0_i32_0 = arith.constant 0 : i32
    return %arg0, %c0_i32 : i32, i32
  }
  func.func @transform_2(%arg0: i32) -> (i32, i32) {
    %c0_i32 = arith.constant 0 : i32
    %c0_i32_0 = arith.constant 0 : i32
    %c0_i32_1 = arith.constant 0 : i32
    return %c0_i32, %c0_i32_0 : i32, i32
  }
  func.func @transform_3(%arg0: i32) -> (i32, i32, i32) {
    %c0_i32 = arith.constant 0 : i32
    %c0_i32_0 = arith.constant 0 : i32
    %c0_i32_1 = arith.constant 0 : i32
    return %arg0, %c0_i32, %c0_i32_0 : i32, i32, i32
  }
}

</mosaic_0001>

<llo_original>
// kernel: tpu_custom_call.1
$region0: #{tpu_custom_call.1}
  #allocation0 [shape = 'u32[]', space=smem, size = 0x4, offset = 0x4, fixed_abs, tag = 'smem constant byte address 0x4 - core index']
  #allocation1 [shape = 'u32[72,128]{1,0:T(1,128)}', space=vmem, size = 0x9000, scoped, tag = 'internal scratch']
  %s0 = inlined_call_operand.hbm [shape: f32[2,128], index: 0, kind: input, shape index: {}]
  %s1 = inlined_call_operand.hbm [shape: f32[2,128], index: 1, kind: input, shape index: {}]
  %s2 = inlined_call_operand.hbm [shape: f32[3,128], index: 2, kind: input, shape index: {}]
  %s3 = inlined_call_operand.hbm [shape: f32[1,8,128], index: 3, kind: output, shape index: {}]
  %s4 = sld [smem:[#allocation0]]
  $region34: #{tpu_custom_call.1} parent=0
    _
  %s6 = ssub.s32 1, %s4
  %s7 = scalar_select 0, %s6, %s4
  $region1: #{tpu_custom_call.1} parent=0
    #allocation2 [shape = 'u8[4096]{0}', space=vmem, size = 0x1000, scoped, tag = 'input window, operand 0, single buffered']
    #allocation3 [shape = 's32[1]{0}', space=sflag, size = 0x4, scoped, tag = 'scoped memory for tpu_custom_call.1']
    #allocation4 [shape = 's32[1]{0}', space=sflag, size = 0x4, scoped, tag = 'scoped memory for tpu_custom_call.1']
    #allocation5 [shape = 'u8[4096]{0}', space=vmem, size = 0x1000, scoped, tag = 'input window, operand 1, single buffered']
    #allocation6 [shape = 's32[1]{0}', space=sflag, size = 0x4, scoped, tag = 'scoped memory for tpu_custom_call.1']
    #allocation7 [shape = 'u8[2048]{0}', space=vmem, size = 0x800, scoped, tag = 'input window, operand 2, single buffered']
    #allocation8 [shape = 'u8[4096]{0}', space=vmem, size = 0x1000, scoped, tag = 'output window, operand 0, single buffered']
    %8 = vsyncpa [#allocation3], 0
    %9 = vsyncpa [#allocation6], 0
    %10 = vsyncpa [#allocation4], 0
    // Predicated region
    $region2: #{tpu_custom_call.1} parent=1 // pred_check
      _
    $region3: #{tpu_custom_call.1} parent=1 // pred_check_branch
      %12 = sbr.rel (0) target = $region5
    $region4: #{tpu_custom_call.1} parent=1 // pred_region
      %14 = vsyncadd [#allocation3], 96
      %s15 = sshll.u32 %s0, 4
      %s16 = int_to_ptr.hbm [resolvable:$true] %s15
      %s17 = sshll.u32 [#allocation2], 4
      %s18 = int_to_ptr.vmem [resolvable:$true] %s17
      %23 = dma.hbm_to_vmem [thread:$0]  %s16, 32, %s18, [#allocation3], 32, 32, 2
    $region5: #{tpu_custom_call.1} parent=1 // pred_fallthru
      _
    // Predicated region
    $region6: #{tpu_custom_call.1} parent=1 // pred_check
      _
    $region7: #{tpu_custom_call.1} parent=1 // pred_check_branch
      %25 = sbr.rel (0) target = $region9
    $region8: #{tpu_custom_call.1} parent=1 // pred_region
      %27 = vsyncadd [#allocation6], 96
      %s28 = sshll.u32 %s1, 4
      %s29 = int_to_ptr.hbm [resolvable:$true] %s28
      %s30 = sshll.u32 [#allocation5], 4
      %s31 = int_to_ptr.vmem [resolvable:$true] %s30
      %36 = dma.hbm_to_vmem [thread:$0]  %s29, 32, %s31, [#allocation6], 32, 32, 2
    $region9: #{tpu_custom_call.1} parent=1 // pred_fallthru
      _
    // Predicated region
    $region10: #{tpu_custom_call.1} parent=1 // pred_check
      _
    $region11: #{tpu_custom_call.1} parent=1 // pred_check_branch
      %38 = sbr.rel (0) target = $region13
    $region12: #{tpu_custom_call.1} parent=1 // pred_region
      %40 = vsyncadd [#allocation6], 0
      %s42 = sshll.u32 %s2, 4
      %s43 = int_to_ptr.hbm [resolvable:$true] %s42
      %s44 = sshll.u32 [#allocation7], 4
      %s45 = int_to_ptr.vmem [resolvable:$true] %s44
      %47 = dma.hbm_to_vmem [thread:$0]  %s43, 64, %s45, [#allocation6]
    $region13: #{tpu_custom_call.1} parent=1 // pred_fallthru
      _
    // Predicated region
    $region14: #{tpu_custom_call.1} parent=1 // pred_check
      _
    $region15: #{tpu_custom_call.1} parent=1 // pred_check_branch
      %49 = sbr.rel (0) target = $region17
    $region16: #{tpu_custom_call.1} parent=1 // pred_region
      %51 = dma.done [#allocation3], 128
    $region17: #{tpu_custom_call.1} parent=1 // pred_fallthru
      _
    // Predicated region
    $region18: #{tpu_custom_call.1} parent=1 // pred_check
      _
    $region19: #{tpu_custom_call.1} parent=1 // pred_check_branch
      %53 = sbr.rel (0) target = $region21
    $region20: #{tpu_custom_call.1} parent=1 // pred_region
      %55 = dma.done [#allocation6], 128
    $region21: #{tpu_custom_call.1} parent=1 // pred_fallthru
      _
    // Predicated region
    $region22: #{tpu_custom_call.1} parent=1 // pred_check
      _
    $region23: #{tpu_custom_call.1} parent=1 // pred_check_branch
      %57 = sbr.rel (0) target = $region25
    $region24: #{tpu_custom_call.1} parent=1 // pred_region
      %59 = dma.done [#allocation6], 64
    $region25: #{tpu_custom_call.1} parent=1 // pred_fallthru
      _
    %s60 = smul.u32 0, 8
    %v61 = vlaneseq
    %v62 = vshrl.u32 %v61, 7
    %v63 = vstv %s60
    %v64 = vadd.s32 %v62, %v63
    %vm65 = vcmp.lt.s32.totalorder %v64, 2
    %v66 = vld [vmem:[#allocation2] sm:$0xff]
    %v67 = vld [vmem:[#allocation5] sm:$0xff]
    %v68 = vsub.f32 %v66, %v67
    %v69 = vmul.f32 %v68, %v68
    %v70 = vsel %vm65, 1, 0
    %vm71 = vcmp.eq.s32.totalorder %v70, 1
    %v72 = vsel %vm71, %v69, 0.0
    %v73 = vrot.slane %v72, 4
    %v74 = vadd.f32 %v72, %v73
    %v75 = vrot.slane %v74, 2
    %v76 = vadd.f32 %v74, %v75
    %v77 = vrot.slane %v76, 1
    %v78 = vadd.f32 %v76, %v77
    %v79 = vld [vmem:[#allocation7] sm:$0x7]
    %v80 = vmul.f32 %v78, %v79
    %vm81 = vcmask 1042432
    %v82 = vsel %vm81, %v80, 0.0
    %83 = vadd.xlane.f32.xlu0 %v82
    %v84 = vpop.xlane.xlu0 %83
    %v85 = vadd.f32 %v84, 0.0
    %s86 = vtos %v85
    %v87 = vrot.slane %v85, 1
    %s88 = vtos %v87
    %v89 = vrot.slane %v85, 2
    %s90 = vtos %v89
    %v91 = vlaneseq
    %v92 = vand.u32 %v91, 127
    %vm93 = vcmp.eq.s32.totalorder %v92, 0
    %vm94 = vcmp.eq.s32.totalorder %v92, 1
    %vm95 = vcmp.eq.s32.totalorder %v92, 2
    %v96 = vstv %s90
    %v97 = vsel %vm95, %v96, 0.0
    %v98 = vstv %s88
    %v99 = vsel %vm94, %v98, %v97
    %v100 = vstv %s86
    %v101 = vsel %vm93, %v100, %v99
    %102 = vst [vmem:[#allocation8] sm:$0xff] %v101
    // Predicated region
    $region26: #{tpu_custom_call.1} parent=1 // pred_check
      _
    $region27: #{tpu_custom_call.1} parent=1 // pred_check_branch
      %104 = sbr.rel (0) target = $region29
    $region28: #{tpu_custom_call.1} parent=1 // pred_region
      %106 = vsyncadd [#allocation4], 0
      %s108 = sshll.u32 [#allocation8], 4
      %s109 = int_to_ptr.vmem [resolvable:$true] %s108
      %s110 = sshll.u32 %s3, 4
      %s111 = int_to_ptr.hbm [resolvable:$true] %s110
      %113 = dma.vmem_to_hbm [thread:$0]  %s109, 128, %s111, [#allocation4]
    $region29: #{tpu_custom_call.1} parent=1 // pred_fallthru
      _
    // Predicated region
    $region30: #{tpu_custom_call.1} parent=1 // pred_check
      _
    $region31: #{tpu_custom_call.1} parent=1 // pred_check_branch
      %115 = sbr.rel (0) target = $region33
    $region32: #{tpu_custom_call.1} parent=1 // pred_region
      %117 = dma.done [#allocation4], 128
    $region33: #{tpu_custom_call.1} parent=1 // pred_fallthru
      _
    %118 = vsyncpa [#allocation3], 1
    %119 = vsyncpa [#allocation6], 1
    %120 = vsyncpa [#allocation4], 1

</llo_original>
